<compile_context>
chip_gen: v5e
topology: v5e:2x2
jax: 0.10.0
libtpu: 0.0.40
codegen_flags: <defaults>
</compile_context>

<pallas_src>
import functools

import jax
import jax.numpy as jnp
from jax import lax
from jax.experimental import pallas as pl
from jax.experimental.pallas import tpu as pltpu


# ----------------------------- parameter glue (plain JAX) --------------------

def initialize_coeffs(init, grid_tensor):
    """c[k] = f[k] at each knot (B1 splines are interpolators)."""
    if init == 'identity':
        return grid_tensor
    elif init == 'zero':
        return grid_tensor * 0.0
    elif init == 'relu':
        return jnp.maximum(grid_tensor, 0.0)
    raise ValueError('init should be in [identity, relu, zero].')


def monotonic_clipping(cs):
    """Project spline coefficients so the spline is monotonically increasing."""
    n = cs.shape[1]
    new_slopes = jnp.clip(cs[:, 1:] - cs[:, :-1], 0.0, None)
    new_slopes = new_slopes.at[:, 0].set(0.0)
    new_slopes = new_slopes.at[:, -1].set(0.0)
    new_cs = jnp.zeros_like(cs)
    new_cs = new_cs.at[:, 1:].set(jnp.cumsum(new_slopes, axis=1))
    new_cs = new_cs + (-new_cs[:, n // 2])[:, None]
    return new_cs


# ----------------------------- Pallas kernels ---------------------------------

def _chunked_spline(x_ref, o_ref, a0, b, ds, knots, row_chunk):
    """out = b + a0*x + sum_j ds[j]*relu(x - knots[j]), applied row-chunk-wise
    so the live set stays within the 64-vreg register file."""
    r_blk = x_ref.shape[0]
    row_chunk = min(row_chunk, r_blk)
    n_full = r_blk // row_chunk
    rem = r_blk - n_full * row_chunk

    def compute(x):
        x = x.astype(jnp.float32)
        out = x * a0 + b
        # 4 VPU ops per interior knot, pure f32, no gathers / integer work.
        for d, t in zip(ds, knots):
            out = out + d * jnp.maximum(x - t, 0.0)
        return out.astype(o_ref.dtype)

    def body(i, carry):
        r0 = pl.multiple_of(i * row_chunk, row_chunk)
        o_ref[pl.ds(r0, row_chunk), :] = compute(x_ref[pl.ds(r0, row_chunk), :])
        return carry

    lax.fori_loop(0, n_full, body, 0)
    if rem:
        r0 = n_full * row_chunk                       # static python int
        o_ref[pl.ds(r0, rem), :] = compute(x_ref[pl.ds(r0, rem), :])


def _spline_kernel_spatial(params_ref, x_ref, o_ref, *, knots, row_chunk):
    """Spatial-on-lanes layout (conv, large H*W).

    params_ref: (C, size) f32 table in SMEM; row c is [a_c, b_c, d_{c,1}, ...].
    x_ref/o_ref: (r_blk, 128) slab of a single (batch, channel).
    """
    c = pl.program_id(1)
    a0 = params_ref[c, 0]
    b = params_ref[c, 1]
    ds = [params_ref[c, 2 + j] for j in range(len(knots))]
    _chunked_spline(x_ref, o_ref, a0, b, ds, knots, row_chunk)


def _spline_kernel_channels_last(params_ref, x_ref, o_ref, *, knots, row_chunk):
    """Channels-on-lanes layout (fc / small H*W conv).

    params_ref: (size, C) f32 in VMEM; row j broadcasts across sublanes.
    x_ref/o_ref: (row_blk, C).
    """
    a0 = params_ref[0:1, :]
    b = params_ref[1:2, :]
    ds = [params_ref[2 + j:3 + j, :] for j in range(len(knots))]
    _chunked_spline(x_ref, o_ref, a0, b, ds, knots, row_chunk)


# ----------------------------- tiling helpers ---------------------------------

_LANES = 128
_MAX_BLOCK_BYTES = 2 * 1024 * 1024     # per block; in+out double-buffered ~ 8 MB
_SPATIAL_HW_THRESHOLD = 1024           # below this, channels-on-lanes wins


def _cdiv(a, b):
    return -(-a // b)


def _sublane_multiple(dtype):
    return {4: 8, 2: 16, 1: 32}.get(jnp.dtype(dtype).itemsize, 8)


def _pick_row_block(rows, sub, max_rows):
    """Row-block size + number of row tiles.  A block equal to the full dim is
    always layout-legal; otherwise keep it a multiple of the sublane packing
    and let Pallas mask the partial last tile."""
    if rows <= max_rows:
        return rows, 1
    blk = max(sub, (max_rows // sub) * sub)
    return blk, _cdiv(rows, blk)


def _pick_row_chunk(lane_groups, sub, row_blk):
    """Rows per in-kernel chunk: keep roughly <= 8 vregs per live value."""
    chunk = max(sub, ((64 // max(lane_groups, 1)) // sub) * sub)
    return max(1, min(chunk, row_blk))


# ----------------------------- module wrapper ----------------------------------

class LinearSplinePallas:
    """JAX/Pallas re-implementation of LinearSpline (forward pass)."""

    def __init__(self, mode, num_activations, size, range_, init='zero',
                 monotonic_constraint=True):
        if mode not in ('conv', 'fc'):
            raise ValueError('Mode should be either "conv" or "fc".')
        self.mode = mode
        self.size = int(size)
        self.even = self.size % 2 == 0
        self.num_activations = int(num_activations)
        self.range_ = float(range_)
        self.grid = 2.0 * self.range_ / float(self.size - 1)
        self.monotonic_constraint = monotonic_constraint
        self.grid_tensor = jnp.broadcast_to(
            jnp.linspace(-self.range_, self.range_, self.size, dtype=jnp.float32),
            (self.num_activations, self.size))
        coefficients = initialize_coeffs(init, self.grid_tensor)
        self.coefficients_vect = coefficients.reshape(-1)          # (C * size,)

    @property
    def coefficients(self):
        return self.coefficients_vect.reshape(self.num_activations, self.size)

    @property
    def projected_coefficients(self):
        if self.monotonic_constraint:
            return monotonic_clipping(self.coefficients)
        return self.coefficients

    # -------- ReLU-expansion parameters (tiny (C, size) work) --------
    def _expansion_params(self):
        coeff = self.projected_coefficients.astype(jnp.float32)    # (C, size)
        size, grid, half = self.size, self.grid, self.size // 2
        shift = 0.5 * grid if self.even else 0.0                   # even-size +grid/2 quirk
        slopes = (coeff[:, 1:] - coeff[:, :-1]) / grid              # (C, size-1)
        a0 = slopes[:, :1]                                          # first-segment slope
        t0 = -half * grid + shift                                   # leftmost knot
        b = coeff[:, :1] - a0 * t0 + shift
        d = slopes[:, 1:] - slopes[:, :-1]                          # (C, size-2)
        params = jnp.concatenate([a0, b, d], axis=1)                # (C, size) f32
        knots = tuple(float((j - half) * grid + shift)
                      for j in range(1, size - 1))
        return params, knots

    # -------- channels-on-lanes path (fc / small H*W conv) --------
    def _forward_channels_last(self, x, params_cs, knots):
        if x.ndim == 4:
            N, C, H, W = x.shape
            x2 = jnp.transpose(x, (0, 2, 3, 1)).reshape(N * H * W, C)
        else:
            N, C = x.shape
            H = W = 1
            x2 = x
        rows = x2.shape[0]

        sub = _sublane_multiple(x2.dtype)
        lane_groups = _cdiv(C, _LANES)
        bytes_per_row = lane_groups * _LANES * jnp.dtype(x2.dtype).itemsize
        max_rows = max(sub, min(2048, (_MAX_BLOCK_BYTES // bytes_per_row // sub) * sub))
        row_blk, row_tiles = _pick_row_block(rows, sub, max_rows)
        row_chunk = _pick_row_chunk(lane_groups, sub, row_blk)

        params_sc = params_cs.T                                     # (size, C)
        kernel = functools.partial(_spline_kernel_channels_last,
                                   knots=knots, row_chunk=row_chunk)
        out = pl.pallas_call(
            kernel,
            out_shape=jax.ShapeDtypeStruct((rows, C), x2.dtype),
            grid=(row_tiles,),
            in_specs=[
                # small (size, C) parameter table, resident in VMEM
                pl.BlockSpec((self.size, C), lambda r: (0, 0)),
                pl.BlockSpec((row_blk, C), lambda r: (r, 0)),
            ],
            out_specs=pl.BlockSpec((row_blk, C), lambda r: (r, 0)),
            compiler_params=pltpu.CompilerParams(
                dimension_semantics=("parallel",)),
        )(params_sc, x2)

        if x.ndim == 4:
            return jnp.transpose(out.reshape(N, H, W, C), (0, 3, 1, 2))
        return out

    # -------- spatial-on-lanes path (conv, large H*W) --------
    def _forward_spatial(self, x, params_cs, knots):
        N, C, H, W = x.shape
        HW = H * W
        R = _cdiv(HW, _LANES)
        x3 = x.reshape(N, C, HW)
        pad = R * _LANES - HW
        if pad:
            x3 = jnp.pad(x3, ((0, 0), (0, 0), (0, pad)))
        x4 = x3.reshape(N, C, R, _LANES)

        sub = _sublane_multiple(x.dtype)
        bytes_per_row = _LANES * jnp.dtype(x.dtype).itemsize
        max_rows = max(sub, min(2048, (_MAX_BLOCK_BYTES // bytes_per_row // sub) * sub))
        r_blk, row_tiles = _pick_row_block(R, sub, max_rows)
        row_chunk = _pick_row_chunk(1, sub, r_blk)

        kernel = functools.partial(_spline_kernel_spatial,
                                   knots=knots, row_chunk=row_chunk)
        out = pl.pallas_call(
            kernel,
            out_shape=jax.ShapeDtypeStruct((N, C, R, _LANES), x.dtype),
            grid=(N, C, row_tiles),
            in_specs=[
                # per-channel scalar table, fully resident in SMEM (2-D, long axis last)
                pl.BlockSpec(memory_space=pltpu.MemorySpace.SMEM),
                pl.BlockSpec((None, None, r_blk, _LANES),
                             lambda n, c, r: (n, c, r, 0)),
            ],
            out_specs=pl.BlockSpec((None, None, r_blk, _LANES),
                                   lambda n, c, r: (n, c, r, 0)),
            compiler_params=pltpu.CompilerParams(
                dimension_semantics=("parallel", "parallel", "parallel")),
        )(params_cs, x4)

        out = out.reshape(N, C, R * _LANES)
        if pad:
            out = out[:, :, :HW]
        return out.reshape(N, C, H, W)

    def __call__(self, x):
        if x.ndim == 2:
            C, HW = x.shape[1], 1
        elif x.ndim == 4:
            C, HW = x.shape[1], x.shape[2] * x.shape[3]
        else:
            raise ValueError('Input must be 2D (fc) or 4D (conv).')
        assert C == self.num_activations

        params_cs, knots = self._expansion_params()
        if x.ndim == 2 or HW < _SPATIAL_HW_THRESHOLD:
            return self._forward_channels_last(x, params_cs, knots)
        return self._forward_spatial(x, params_cs, knots)


# ----------------------------- pure-JAX reference ----------------------------

def reference_forward(x, module):
    """Direct mirror of the PyTorch LinearSpline_Func.forward semantics."""
    orig_shape = x.shape
    if x.ndim == 2:
        x = x.reshape(x.shape[0], x.shape[1], 1, 1)
    coeff_vect = module.projected_coefficients.reshape(-1)
    size, grid, even = module.size, module.grid, module.even
    C = module.num_activations
    half = size // 2
    zero_knot_indexes = jnp.arange(C) * size + half

    if even:
        x = x - grid / 2
        max_range = grid * (half - 2)
    else:
        max_range = grid * (half - 1)
    x_clamped = jnp.clip(x, -(grid * half), max_range)
    floored = jnp.floor(x_clamped / grid)
    fracs = x / grid - floored
    indexes = (zero_knot_indexes.reshape(1, -1, 1, 1) + floored).astype(jnp.int32)
    out = (jnp.take(coeff_vect, indexes + 1) * fracs
           + jnp.take(coeff_vect, indexes) * (1 - fracs))
    if even:
        out = out + grid / 2
    return out.reshape(orig_shape)


def _assert_close(out, ref, tol=1e-4):
    err = float(jnp.max(jnp.abs(out - ref)))
    scale = float(jnp.max(jnp.abs(ref))) + 1.0
    assert err <= tol * scale, f"max abs err {err} (scale {scale})"


# ----------------------------- demo -------------------------------------------

if __name__ == "__main__":
    key = jax.random.PRNGKey(0)
    ks = jax.random.split(key, 6)

    # 1) conv, small H*W  -> channels-on-lanes layout, odd size, monotonic.
    N, C, H, W = 2, 4, 16, 16
    mod1 = LinearSplinePallas('conv', num_activations=C, size=21, range_=1.0,
                              init='relu', monotonic_constraint=True)
    mod1.coefficients_vect = mod1.coefficients_vect + 0.05 * jax.random.normal(
        ks[0], mod1.coefficients_vect.shape, dtype=jnp.float32)
    x1 = 1.5 * jax.random.normal(ks[1], (N, C, H, W), dtype=jnp.float32)
    out1 = jax.block_until_ready(mod1(x1))
    assert out1.shape == x1.shape and out1.dtype == x1.dtype
    _assert_close(out1, reference_forward(x1, mod1))

    # 2) fc (2-D input), EVEN size, no monotonic constraint (extrapolation path).
    Nf, Cf = 8, 32
    mod2 = LinearSplinePallas('fc', num_activations=Cf, size=20, range_=1.0,
                              init='identity', monotonic_constraint=False)
    mod2.coefficients_vect = mod2.coefficients_vect + 0.05 * jax.random.normal(
        ks[2], mod2.coefficients_vect.shape, dtype=jnp.float32)
    x2 = 2.0 * jax.random.normal(ks[3], (Nf, Cf), dtype=jnp.float32)
    out2 = jax.block_until_ready(mod2(x2))
    assert out2.shape == x2.shape and out2.dtype == x2.dtype
    _assert_close(out2, reference_forward(x2, mod2))

    # 3) conv, H*W >= 1024 and not a multiple of 128 -> spatial layout + lane pad.
    N3, C3, H3, W3 = 1, 3, 36, 36
    mod3 = LinearSplinePallas('conv', num_activations=C3, size=11, range_=2.0,
                              init='relu', monotonic_constraint=True)
    mod3.coefficients_vect = mod3.coefficients_vect + 0.05 * jax.random.normal(
        ks[4], mod3.coefficients_vect.shape, dtype=jnp.float32)
    x3 = 3.0 * jax.random.normal(ks[5], (N3, C3, H3, W3), dtype=jnp.float32)
    out3 = jax.block_until_ready(mod3(x3))
    assert out3.shape == x3.shape and out3.dtype == x3.dtype
    _assert_close(out3, reference_forward(x3, mod3))

    print("KERNEL_OK")
</pallas_src>

<mosaic_0001>
module attributes {stable_mosaic.version = 11 : i64} {
  func.func @_spline_kernel_channels_last(%arg0: i32, %arg1: memref<21x4xf32, #tpu.memory_space<vmem>>, %arg2: memref<512x4xf32, #tpu.memory_space<vmem>>, %arg3: memref<512x4xf32, #tpu.memory_space<vmem>>) attributes {dimension_semantics = [#tpu.dimension_semantics<parallel>], iteration_bounds = array<i64: 1>, scalar_prefetch = 0 : i64, scratch_operands = 0 : i64, tpu.core_type = #tpu.core_type<tc>, window_params = [{pipeline_mode = #tpu.pipeline_mode<synchronous>, transform_indices = @transform_0, window_bounds = array<i64: 21, 4>}, {transform_indices = @transform_1, window_bounds = array<i64: 512, 4>}, {transform_indices = @transform_2, window_bounds = array<i64: 512, 4>}]} {
    %c0 = arith.constant 0 : index
    %c0_0 = arith.constant 0 : index
    %0 = vector.load %arg1[%c0, %c0_0] : memref<21x4xf32, #tpu.memory_space<vmem>>, vector<1x4xf32>
    %c1 = arith.constant 1 : index
    %c0_1 = arith.constant 0 : index
    %1 = vector.load %arg1[%c1, %c0_1] : memref<21x4xf32, #tpu.memory_space<vmem>>, vector<1x4xf32>
    %c2 = arith.constant 2 : index
    %c0_2 = arith.constant 0 : index
    %2 = vector.load %arg1[%c2, %c0_2] : memref<21x4xf32, #tpu.memory_space<vmem>>, vector<1x4xf32>
    %c3 = arith.constant 3 : index
    %c0_3 = arith.constant 0 : index
    %3 = vector.load %arg1[%c3, %c0_3] : memref<21x4xf32, #tpu.memory_space<vmem>>, vector<1x4xf32>
    %c4 = arith.constant 4 : index
    %c0_4 = arith.constant 0 : index
    %4 = vector.load %arg1[%c4, %c0_4] : memref<21x4xf32, #tpu.memory_space<vmem>>, vector<1x4xf32>
    %c5 = arith.constant 5 : index
    %c0_5 = arith.constant 0 : index
    %5 = vector.load %arg1[%c5, %c0_5] : memref<21x4xf32, #tpu.memory_space<vmem>>, vector<1x4xf32>
    %c6 = arith.constant 6 : index
    %c0_6 = arith.constant 0 : index
    %6 = vector.load %arg1[%c6, %c0_6] : memref<21x4xf32, #tpu.memory_space<vmem>>, vector<1x4xf32>
    %c7 = arith.constant 7 : index
    %c0_7 = arith.constant 0 : index
    %7 = vector.load %arg1[%c7, %c0_7] : memref<21x4xf32, #tpu.memory_space<vmem>>, vector<1x4xf32>
    %c8 = arith.constant 8 : index
    %c0_8 = arith.constant 0 : index
    %8 = vector.load %arg1[%c8, %c0_8] : memref<21x4xf32, #tpu.memory_space<vmem>>, vector<1x4xf32>
    %c9 = arith.constant 9 : index
    %c0_9 = arith.constant 0 : index
    %9 = vector.load %arg1[%c9, %c0_9] : memref<21x4xf32, #tpu.memory_space<vmem>>, vector<1x4xf32>
    %c10 = arith.constant 10 : index
    %c0_10 = arith.constant 0 : index
    %10 = vector.load %arg1[%c10, %c0_10] : memref<21x4xf32, #tpu.memory_space<vmem>>, vector<1x4xf32>
    %c11 = arith.constant 11 : index
    %c0_11 = arith.constant 0 : index
    %11 = vector.load %arg1[%c11, %c0_11] : memref<21x4xf32, #tpu.memory_space<vmem>>, vector<1x4xf32>
    %c12 = arith.constant 12 : index
    %c0_12 = arith.constant 0 : index
    %12 = vector.load %arg1[%c12, %c0_12] : memref<21x4xf32, #tpu.memory_space<vmem>>, vector<1x4xf32>
    %c13 = arith.constant 13 : index
    %c0_13 = arith.constant 0 : index
    %13 = vector.load %arg1[%c13, %c0_13] : memref<21x4xf32, #tpu.memory_space<vmem>>, vector<1x4xf32>
    %c14 = arith.constant 14 : index
    %c0_14 = arith.constant 0 : index
    %14 = vector.load %arg1[%c14, %c0_14] : memref<21x4xf32, #tpu.memory_space<vmem>>, vector<1x4xf32>
    %c15 = arith.constant 15 : index
    %c0_15 = arith.constant 0 : index
    %15 = vector.load %arg1[%c15, %c0_15] : memref<21x4xf32, #tpu.memory_space<vmem>>, vector<1x4xf32>
    %c16 = arith.constant 16 : index
    %c0_16 = arith.constant 0 : index
    %16 = vector.load %arg1[%c16, %c0_16] : memref<21x4xf32, #tpu.memory_space<vmem>>, vector<1x4xf32>
    %c17 = arith.constant 17 : index
    %c0_17 = arith.constant 0 : index
    %17 = vector.load %arg1[%c17, %c0_17] : memref<21x4xf32, #tpu.memory_space<vmem>>, vector<1x4xf32>
    %c18 = arith.constant 18 : index
    %c0_18 = arith.constant 0 : index
    %18 = vector.load %arg1[%c18, %c0_18] : memref<21x4xf32, #tpu.memory_space<vmem>>, vector<1x4xf32>
    %c19 = arith.constant 19 : index
    %c0_19 = arith.constant 0 : index
    %19 = vector.load %arg1[%c19, %c0_19] : memref<21x4xf32, #tpu.memory_space<vmem>>, vector<1x4xf32>
    %c20 = arith.constant 20 : index
    %c0_20 = arith.constant 0 : index
    %20 = vector.load %arg1[%c20, %c0_20] : memref<21x4xf32, #tpu.memory_space<vmem>>, vector<1x4xf32>
    %c0_i32 = arith.constant 0 : i32
    %c8_i32 = arith.constant 8 : i32
    %21 = arith.addi %c0_i32, %c8_i32 : i32
    %c1_i32 = arith.constant 1 : i32
    scf.for %arg4 = %c0_i32 to %21 step %c1_i32  : i32 {
      %c64_i32 = arith.constant 64 : i32
      %22 = arith.muli %arg4, %c64_i32 : i32
      %23 = tpu.assume_multiple %22, 64 : i32
      %24 = arith.index_cast %23 : i32 to index
      %c0_22 = arith.constant 0 : index
      %25 = vector.load %arg2[%24, %c0_22] : memref<512x4xf32, #tpu.memory_space<vmem>>, vector<64x4xf32>
      %26 = vector.broadcast %0 : vector<1x4xf32> to vector<64x4xf32>
      %27 = arith.mulf %25, %26 : vector<64x4xf32>
      %28 = vector.broadcast %1 : vector<1x4xf32> to vector<64x4xf32>
      %29 = arith.addf %27, %28 : vector<64x4xf32>
      %cst = arith.constant -0.899999976 : f32
      %30 = vector.broadcast %cst : f32 to vector<64x4xf32>
      %31 = arith.subf %25, %30 : vector<64x4xf32>
      %cst_23 = arith.constant 0.000000e+00 : f32
      %32 = vector.broadcast %cst_23 : f32 to vector<64x4xf32>
      %33 = arith.maximumf %31, %32 : vector<64x4xf32>
      %34 = vector.broadcast %2 : vector<1x4xf32> to vector<64x4xf32>
      %35 = arith.mulf %34, %33 : vector<64x4xf32>
      %36 = arith.addf %29, %35 : vector<64x4xf32>
      %cst_24 = arith.constant -8.000000e-01 : f32
      %37 = vector.broadcast %cst_24 : f32 to vector<64x4xf32>
      %38 = arith.subf %25, %37 : vector<64x4xf32>
      %cst_25 = arith.constant 0.000000e+00 : f32
      %39 = vector.broadcast %cst_25 : f32 to vector<64x4xf32>
      %40 = arith.maximumf %38, %39 : vector<64x4xf32>
      %41 = vector.broadcast %3 : vector<1x4xf32> to vector<64x4xf32>
      %42 = arith.mulf %41, %40 : vector<64x4xf32>
      %43 = arith.addf %36, %42 : vector<64x4xf32>
      %cst_26 = arith.constant -0.699999988 : f32
      %44 = vector.broadcast %cst_26 : f32 to vector<64x4xf32>
      %45 = arith.subf %25, %44 : vector<64x4xf32>
      %cst_27 = arith.constant 0.000000e+00 : f32
      %46 = vector.broadcast %cst_27 : f32 to vector<64x4xf32>
      %47 = arith.maximumf %45, %46 : vector<64x4xf32>
      %48 = vector.broadcast %4 : vector<1x4xf32> to vector<64x4xf32>
      %49 = arith.mulf %48, %47 : vector<64x4xf32>
      %50 = arith.addf %43, %49 : vector<64x4xf32>
      %cst_28 = arith.constant -6.000000e-01 : f32
      %51 = vector.broadcast %cst_28 : f32 to vector<64x4xf32>
      %52 = arith.subf %25, %51 : vector<64x4xf32>
      %cst_29 = arith.constant 0.000000e+00 : f32
      %53 = vector.broadcast %cst_29 : f32 to vector<64x4xf32>
      %54 = arith.maximumf %52, %53 : vector<64x4xf32>
      %55 = vector.broadcast %5 : vector<1x4xf32> to vector<64x4xf32>
      %56 = arith.mulf %55, %54 : vector<64x4xf32>
      %57 = arith.addf %50, %56 : vector<64x4xf32>
      %cst_30 = arith.constant -5.000000e-01 : f32
      %58 = vector.broadcast %cst_30 : f32 to vector<64x4xf32>
      %59 = arith.subf %25, %58 : vector<64x4xf32>
      %cst_31 = arith.constant 0.000000e+00 : f32
      %60 = vector.broadcast %cst_31 : f32 to vector<64x4xf32>
      %61 = arith.maximumf %59, %60 : vector<64x4xf32>
      %62 = vector.broadcast %6 : vector<1x4xf32> to vector<64x4xf32>
      %63 = arith.mulf %62, %61 : vector<64x4xf32>
      %64 = arith.addf %57, %63 : vector<64x4xf32>
      %cst_32 = arith.constant -4.000000e-01 : f32
      %65 = vector.broadcast %cst_32 : f32 to vector<64x4xf32>
      %66 = arith.subf %25, %65 : vector<64x4xf32>
      %cst_33 = arith.constant 0.000000e+00 : f32
      %67 = vector.broadcast %cst_33 : f32 to vector<64x4xf32>
      %68 = arith.maximumf %66, %67 : vector<64x4xf32>
      %69 = vector.broadcast %7 : vector<1x4xf32> to vector<64x4xf32>
      %70 = arith.mulf %69, %68 : vector<64x4xf32>
      %71 = arith.addf %64, %70 : vector<64x4xf32>
      %cst_34 = arith.constant -3.000000e-01 : f32
      %72 = vector.broadcast %cst_34 : f32 to vector<64x4xf32>
      %73 = arith.subf %25, %72 : vector<64x4xf32>
      %cst_35 = arith.constant 0.000000e+00 : f32
      %74 = vector.broadcast %cst_35 : f32 to vector<64x4xf32>
      %75 = arith.maximumf %73, %74 : vector<64x4xf32>
      %76 = vector.broadcast %8 : vector<1x4xf32> to vector<64x4xf32>
      %77 = arith.mulf %76, %75 : vector<64x4xf32>
      %78 = arith.addf %71, %77 : vector<64x4xf32>
      %cst_36 = arith.constant -2.000000e-01 : f32
      %79 = vector.broadcast %cst_36 : f32 to vector<64x4xf32>
      %80 = arith.subf %25, %79 : vector<64x4xf32>
      %cst_37 = arith.constant 0.000000e+00 : f32
      %81 = vector.broadcast %cst_37 : f32 to vector<64x4xf32>
      %82 = arith.maximumf %80, %81 : vector<64x4xf32>
      %83 = vector.broadcast %9 : vector<1x4xf32> to vector<64x4xf32>
      %84 = arith.mulf %83, %82 : vector<64x4xf32>
      %85 = arith.addf %78, %84 : vector<64x4xf32>
      %cst_38 = arith.constant -1.000000e-01 : f32
      %86 = vector.broadcast %cst_38 : f32 to vector<64x4xf32>
      %87 = arith.subf %25, %86 : vector<64x4xf32>
      %cst_39 = arith.constant 0.000000e+00 : f32
      %88 = vector.broadcast %cst_39 : f32 to vector<64x4xf32>
      %89 = arith.maximumf %87, %88 : vector<64x4xf32>
      %90 = vector.broadcast %10 : vector<1x4xf32> to vector<64x4xf32>
      %91 = arith.mulf %90, %89 : vector<64x4xf32>
      %92 = arith.addf %85, %91 : vector<64x4xf32>
      %cst_40 = arith.constant 0.000000e+00 : f32
      %93 = vector.broadcast %cst_40 : f32 to vector<64x4xf32>
      %94 = arith.subf %25, %93 : vector<64x4xf32>
      %cst_41 = arith.constant 0.000000e+00 : f32
      %95 = vector.broadcast %cst_41 : f32 to vector<64x4xf32>
      %96 = arith.maximumf %94, %95 : vector<64x4xf32>
      %97 = vector.broadcast %11 : vector<1x4xf32> to vector<64x4xf32>
      %98 = arith.mulf %97, %96 : vector<64x4xf32>
      %99 = arith.addf %92, %98 : vector<64x4xf32>
      %cst_42 = arith.constant 1.000000e-01 : f32
      %100 = vector.broadcast %cst_42 : f32 to vector<64x4xf32>
      %101 = arith.subf %25, %100 : vector<64x4xf32>
      %cst_43 = arith.constant 0.000000e+00 : f32
      %102 = vector.broadcast %cst_43 : f32 to vector<64x4xf32>
      %103 = arith.maximumf %101, %102 : vector<64x4xf32>
      %104 = vector.broadcast %12 : vector<1x4xf32> to vector<64x4xf32>
      %105 = arith.mulf %104, %103 : vector<64x4xf32>
      %106 = arith.addf %99, %105 : vector<64x4xf32>
      %cst_44 = arith.constant 2.000000e-01 : f32
      %107 = vector.broadcast %cst_44 : f32 to vector<64x4xf32>
      %108 = arith.subf %25, %107 : vector<64x4xf32>
      %cst_45 = arith.constant 0.000000e+00 : f32
      %109 = vector.broadcast %cst_45 : f32 to vector<64x4xf32>
      %110 = arith.maximumf %108, %109 : vector<64x4xf32>
      %111 = vector.broadcast %13 : vector<1x4xf32> to vector<64x4xf32>
      %112 = arith.mulf %111, %110 : vector<64x4xf32>
      %113 = arith.addf %106, %112 : vector<64x4xf32>
      %cst_46 = arith.constant 3.000000e-01 : f32
      %114 = vector.broadcast %cst_46 : f32 to vector<64x4xf32>
      %115 = arith.subf %25, %114 : vector<64x4xf32>
      %cst_47 = arith.constant 0.000000e+00 : f32
      %116 = vector.broadcast %cst_47 : f32 to vector<64x4xf32>
      %117 = arith.maximumf %115, %116 : vector<64x4xf32>
      %118 = vector.broadcast %14 : vector<1x4xf32> to vector<64x4xf32>
      %119 = arith.mulf %118, %117 : vector<64x4xf32>
      %120 = arith.addf %113, %119 : vector<64x4xf32>
      %cst_48 = arith.constant 4.000000e-01 : f32
      %121 = vector.broadcast %cst_48 : f32 to vector<64x4xf32>
      %122 = arith.subf %25, %121 : vector<64x4xf32>
      %cst_49 = arith.constant 0.000000e+00 : f32
      %123 = vector.broadcast %cst_49 : f32 to vector<64x4xf32>
      %124 = arith.maximumf %122, %123 : vector<64x4xf32>
      %125 = vector.broadcast %15 : vector<1x4xf32> to vector<64x4xf32>
      %126 = arith.mulf %125, %124 : vector<64x4xf32>
      %127 = arith.addf %120, %126 : vector<64x4xf32>
      %cst_50 = arith.constant 5.000000e-01 : f32
      %128 = vector.broadcast %cst_50 : f32 to vector<64x4xf32>
      %129 = arith.subf %25, %128 : vector<64x4xf32>
      %cst_51 = arith.constant 0.000000e+00 : f32
      %130 = vector.broadcast %cst_51 : f32 to vector<64x4xf32>
      %131 = arith.maximumf %129, %130 : vector<64x4xf32>
      %132 = vector.broadcast %16 : vector<1x4xf32> to vector<64x4xf32>
      %133 = arith.mulf %132, %131 : vector<64x4xf32>
      %134 = arith.addf %127, %133 : vector<64x4xf32>
      %cst_52 = arith.constant 6.000000e-01 : f32
      %135 = vector.broadcast %cst_52 : f32 to vector<64x4xf32>
      %136 = arith.subf %25, %135 : vector<64x4xf32>
      %cst_53 = arith.constant 0.000000e+00 : f32
      %137 = vector.broadcast %cst_53 : f32 to vector<64x4xf32>
      %138 = arith.maximumf %136, %137 : vector<64x4xf32>
      %139 = vector.broadcast %17 : vector<1x4xf32> to vector<64x4xf32>
      %140 = arith.mulf %139, %138 : vector<64x4xf32>
      %141 = arith.addf %134, %140 : vector<64x4xf32>
      %cst_54 = arith.constant 0.699999988 : f32
      %142 = vector.broadcast %cst_54 : f32 to vector<64x4xf32>
      %143 = arith.subf %25, %142 : vector<64x4xf32>
      %cst_55 = arith.constant 0.000000e+00 : f32
      %144 = vector.broadcast %cst_55 : f32 to vector<64x4xf32>
      %145 = arith.maximumf %143, %144 : vector<64x4xf32>
      %146 = vector.broadcast %18 : vector<1x4xf32> to vector<64x4xf32>
      %147 = arith.mulf %146, %145 : vector<64x4xf32>
      %148 = arith.addf %141, %147 : vector<64x4xf32>
      %cst_56 = arith.constant 8.000000e-01 : f32
      %149 = vector.broadcast %cst_56 : f32 to vector<64x4xf32>
      %150 = arith.subf %25, %149 : vector<64x4xf32>
      %cst_57 = arith.constant 0.000000e+00 : f32
      %151 = vector.broadcast %cst_57 : f32 to vector<64x4xf32>
      %152 = arith.maximumf %150, %151 : vector<64x4xf32>
      %153 = vector.broadcast %19 : vector<1x4xf32> to vector<64x4xf32>
      %154 = arith.mulf %153, %152 : vector<64x4xf32>
      %155 = arith.addf %148, %154 : vector<64x4xf32>
      %cst_58 = arith.constant 0.899999976 : f32
      %156 = vector.broadcast %cst_58 : f32 to vector<64x4xf32>
      %157 = arith.subf %25, %156 : vector<64x4xf32>
      %cst_59 = arith.constant 0.000000e+00 : f32
      %158 = vector.broadcast %cst_59 : f32 to vector<64x4xf32>
      %159 = arith.maximumf %157, %158 : vector<64x4xf32>
      %160 = vector.broadcast %20 : vector<1x4xf32> to vector<64x4xf32>
      %161 = arith.mulf %160, %159 : vector<64x4xf32>
      %162 = arith.addf %155, %161 : vector<64x4xf32>
      %163 = arith.index_cast %23 : i32 to index
      %c0_60 = arith.constant 0 : index
      %164 = vector.load %arg3[%163, %c0_60] : memref<512x4xf32, #tpu.memory_space<vmem>>, vector<64x4xf32>
      tpu.vector_store %arg3[%163, %c0_60], %162 {strides = array<i32>} : memref<512x4xf32, #tpu.memory_space<vmem>>, vector<64x4xf32>,
    }
    %c8_i32_21 = arith.constant 8 : i32
    return
  }
  func.func @transform_0(%arg0: i32) -> (i32, i32) {
    %c0_i32 = arith.constant 0 : i32
    %c0_i32_0 = arith.constant 0 : i32
    %c0_i32_1 = arith.constant 0 : i32
    return %c0_i32, %c0_i32_0 : i32, i32
  }
  func.func @transform_1(%arg0: i32) -> (i32, i32) {
    %c0_i32 = arith.constant 0 : i32
    %c0_i32_0 = arith.constant 0 : i32
    return %arg0, %c0_i32 : i32, i32
  }
  func.func @transform_2(%arg0: i32) -> (i32, i32) {
    %c0_i32 = arith.constant 0 : i32
    %c0_i32_0 = arith.constant 0 : i32
    return %arg0, %c0_i32 : i32, i32
  }
}

</mosaic_0001>

<llo_original>
// kernel: tpu_custom_call.1
$region0: #{tpu_custom_call.1}
  #allocation0 [shape = 'u32[]', space=smem, size = 0x4, offset = 0x4, fixed_abs, tag = 'smem constant byte address 0x4 - core index']
  #allocation1 [shape = 'u32[72,128]{1,0:T(1,128)}', space=vmem, size = 0x9000, scoped, tag = 'internal scratch']
  %s0 = inlined_call_operand.vmem [shape: f32[21,4], index: 0, kind: input, shape index: {}]
  %s1 = inlined_call_operand.vmem [shape: f32[512,4], index: 1, kind: input, shape index: {}]
  %s2 = inlined_call_operand.vmem [shape: f32[512,4], index: 2, kind: output, shape index: {}]
  %s3 = sld [smem:[#allocation0]]
  $region25: #{tpu_custom_call.1} parent=0
    _
  %s5 = ssub.s32 1, %s3
  %s6 = scalar_select 0, %s5, %s3
  // Predicated region
  $region2: #{tpu_custom_call.1} parent=0 // pred_check
    _
  $region3: #{tpu_custom_call.1} parent=0 // pred_check_branch
    %8 = sbr.rel (0) target = $region5
  $region4: #{tpu_custom_call.1} parent=0 // pred_region
    _
  $region5: #{tpu_custom_call.1} parent=0 // pred_fallthru
    _
  // Predicated region
  $region6: #{tpu_custom_call.1} parent=0 // pred_check
    _
  $region7: #{tpu_custom_call.1} parent=0 // pred_check_branch
    %10 = sbr.rel (0) target = $region9
  $region8: #{tpu_custom_call.1} parent=0 // pred_region
    _
  $region9: #{tpu_custom_call.1} parent=0 // pred_fallthru
    _
  %v11 = vld [vmem:[%s0] sm:$0x1]
  %v12 = vld [vmem:[%s0 + $0x1] sm:$0x1]
  %v13 = vld [vmem:[%s0 + $0x2] sm:$0x1]
  %v14 = vld [vmem:[%s0 + $0x3] sm:$0x1]
  %v15 = vld [vmem:[%s0 + $0x4] sm:$0x1]
  %v16 = vld [vmem:[%s0 + $0x5] sm:$0x1]
  %v17 = vld [vmem:[%s0 + $0x6] sm:$0x1]
  %v18 = vld [vmem:[%s0 + $0x7] sm:$0x1]
  %v19 = vld [vmem:[%s0 + $0x8] sm:$0x1]
  %v20 = vld [vmem:[%s0 + $0x9] sm:$0x1]
  %v21 = vld [vmem:[%s0 + $0xa] sm:$0x1]
  %v22 = vld [vmem:[%s0 + $0xb] sm:$0x1]
  %v23 = vld [vmem:[%s0 + $0xc] sm:$0x1]
  %v24 = vld [vmem:[%s0 + $0xd] sm:$0x1]
  %v25 = vld [vmem:[%s0 + $0xe] sm:$0x1]
  %v26 = vld [vmem:[%s0 + $0xf] sm:$0x1]
  %v27 = vld [vmem:[%s0 + $0x10] sm:$0x1]
  %v28 = vld [vmem:[%s0 + $0x11] sm:$0x1]
  %v29 = vld [vmem:[%s0 + $0x12] sm:$0x1]
  %v30 = vld [vmem:[%s0 + $0x13] sm:$0x1]
  %v31 = vld [vmem:[%s0 + $0x14] sm:$0x1]
  loop: start=0, step=1, limit=8
  $region10: #{tpu_custom_call.1} parent=0 // loop_pre_header
    _
  $region11: #{tpu_custom_call.1} parent=0 // loop_header
    %s33 = sphi 0, %s37
    %p34 = scmp.ge.s32.totalorder %s33, 8
  $region12: #{tpu_custom_call.1} parent=0 // loop_header_branch
    %36 = sbr.rel (%p34) target = $region16
  $region13: #{tpu_custom_call.1} parent=0 // loop_body
    %s38 = smul.u32 %s33, 64
    %s39 = scalar_lea.vmem %s1, %s38
    %v40 = vld [vmem:[%s39] sm:$0xff]
    %v41 = vld [vmem:[%s39 + $0x8] sm:$0xff]
    %v42 = vld [vmem:[%s39 + $0x10] sm:$0xff]
    %v43 = vld [vmem:[%s39 + $0x18] sm:$0xff]
    %v44 = vld [vmem:[%s39 + $0x20] sm:$0xff]
    %v45 = vld [vmem:[%s39 + $0x28] sm:$0xff]
    %v46 = vld [vmem:[%s39 + $0x30] sm:$0xff]
    %v47 = vld [vmem:[%s39 + $0x38] sm:$0xff]
    %v48 = vperm.slane %v11, 0
    %v49 = vmul.f32 %v40, %v48
    %v50 = vmul.f32 %v41, %v48
    %v51 = vmul.f32 %v42, %v48
    %v52 = vmul.f32 %v43, %v48
    %v53 = vmul.f32 %v44, %v48
    %v54 = vmul.f32 %v45, %v48
    %v55 = vmul.f32 %v46, %v48
    %v56 = vmul.f32 %v47, %v48
    %v57 = vperm.slane %v12, 0
    %v58 = vadd.f32 %v49, %v57
    %v59 = vadd.f32 %v50, %v57
    %v60 = vadd.f32 %v51, %v57
    %v61 = vadd.f32 %v52, %v57
    %v62 = vadd.f32 %v53, %v57
    %v63 = vadd.f32 %v54, %v57
    %v64 = vadd.f32 %v55, %v57
    %v65 = vadd.f32 %v56, %v57
    %v66 = vsub.f32 %v40, -0.9
    %v67 = vsub.f32 %v41, -0.9
    %v68 = vsub.f32 %v42, -0.9
    %v69 = vsub.f32 %v43, -0.9
    %v70 = vsub.f32 %v44, -0.9
    %v71 = vsub.f32 %v45, -0.9
    %v72 = vsub.f32 %v46, -0.9
    %v73 = vsub.f32 %v47, -0.9
    %v74 = vmax.f32 %v66, 0.0
    %v75 = vmax.f32 %v67, 0.0
    %v76 = vmax.f32 %v68, 0.0
    %v77 = vmax.f32 %v69, 0.0
    %v78 = vmax.f32 %v70, 0.0
    %v79 = vmax.f32 %v71, 0.0
    %v80 = vmax.f32 %v72, 0.0
    %v81 = vmax.f32 %v73, 0.0
    %v82 = vperm.slane %v13, 0
    %v83 = vmul.f32 %v82, %v74
    %v84 = vmul.f32 %v82, %v75
    %v85 = vmul.f32 %v82, %v76
    %v86 = vmul.f32 %v82, %v77
    %v87 = vmul.f32 %v82, %v78
    %v88 = vmul.f32 %v82, %v79
    %v89 = vmul.f32 %v82, %v80
    %v90 = vmul.f32 %v82, %v81
    %v91 = vadd.f32 %v58, %v83
    %v92 = vadd.f32 %v59, %v84
    %v93 = vadd.f32 %v60, %v85
    %v94 = vadd.f32 %v61, %v86
    %v95 = vadd.f32 %v62, %v87
    %v96 = vadd.f32 %v63, %v88
    %v97 = vadd.f32 %v64, %v89
    %v98 = vadd.f32 %v65, %v90
    %v99 = vsub.f32 %v40, -0.8
    %v100 = vsub.f32 %v41, -0.8
    %v101 = vsub.f32 %v42, -0.8
    %v102 = vsub.f32 %v43, -0.8
    %v103 = vsub.f32 %v44, -0.8
    %v104 = vsub.f32 %v45, -0.8
    %v105 = vsub.f32 %v46, -0.8
    %v106 = vsub.f32 %v47, -0.8
    %v107 = vmax.f32 %v99, 0.0
    %v108 = vmax.f32 %v100, 0.0
    %v109 = vmax.f32 %v101, 0.0
    %v110 = vmax.f32 %v102, 0.0
    %v111 = vmax.f32 %v103, 0.0
    %v112 = vmax.f32 %v104, 0.0
    %v113 = vmax.f32 %v105, 0.0
    %v114 = vmax.f32 %v106, 0.0
    %v115 = vperm.slane %v14, 0
    %v116 = vmul.f32 %v115, %v107
    %v117 = vmul.f32 %v115, %v108
    %v118 = vmul.f32 %v115, %v109
    %v119 = vmul.f32 %v115, %v110
    %v120 = vmul.f32 %v115, %v111
    %v121 = vmul.f32 %v115, %v112
    %v122 = vmul.f32 %v115, %v113
    %v123 = vmul.f32 %v115, %v114
    %v124 = vadd.f32 %v91, %v116
    %v125 = vadd.f32 %v92, %v117
    %v126 = vadd.f32 %v93, %v118
    %v127 = vadd.f32 %v94, %v119
    %v128 = vadd.f32 %v95, %v120
    %v129 = vadd.f32 %v96, %v121
    %v130 = vadd.f32 %v97, %v122
    %v131 = vadd.f32 %v98, %v123
    %v132 = vsub.f32 %v40, -0.7
    %v133 = vsub.f32 %v41, -0.7
    %v134 = vsub.f32 %v42, -0.7
    %v135 = vsub.f32 %v43, -0.7
    %v136 = vsub.f32 %v44, -0.7
    %v137 = vsub.f32 %v45, -0.7
    %v138 = vsub.f32 %v46, -0.7
    %v139 = vsub.f32 %v47, -0.7
    %v140 = vmax.f32 %v132, 0.0
    %v141 = vmax.f32 %v133, 0.0
    %v142 = vmax.f32 %v134, 0.0
    %v143 = vmax.f32 %v135, 0.0
    %v144 = vmax.f32 %v136, 0.0
    %v145 = vmax.f32 %v137, 0.0
    %v146 = vmax.f32 %v138, 0.0
    %v147 = vmax.f32 %v139, 0.0
    %v148 = vperm.slane %v15, 0
    %v149 = vmul.f32 %v148, %v140
    %v150 = vmul.f32 %v148, %v141
    %v151 = vmul.f32 %v148, %v142
    %v152 = vmul.f32 %v148, %v143
    %v153 = vmul.f32 %v148, %v144
    %v154 = vmul.f32 %v148, %v145
    %v155 = vmul.f32 %v148, %v146
    %v156 = vmul.f32 %v148, %v147
    %v157 = vadd.f32 %v124, %v149
    %v158 = vadd.f32 %v125, %v150
    %v159 = vadd.f32 %v126, %v151
    %v160 = vadd.f32 %v127, %v152
    %v161 = vadd.f32 %v128, %v153
    %v162 = vadd.f32 %v129, %v154
    %v163 = vadd.f32 %v130, %v155
    %v164 = vadd.f32 %v131, %v156
    %v165 = vsub.f32 %v40, -0.6
    %v166 = vsub.f32 %v41, -0.6
    %v167 = vsub.f32 %v42, -0.6
    %v168 = vsub.f32 %v43, -0.6
    %v169 = vsub.f32 %v44, -0.6
    %v170 = vsub.f32 %v45, -0.6
    %v171 = vsub.f32 %v46, -0.6
    %v172 = vsub.f32 %v47, -0.6
    %v173 = vmax.f32 %v165, 0.0
    %v174 = vmax.f32 %v166, 0.0
    %v175 = vmax.f32 %v167, 0.0
    %v176 = vmax.f32 %v168, 0.0
    %v177 = vmax.f32 %v169, 0.0
    %v178 = vmax.f32 %v170, 0.0
    %v179 = vmax.f32 %v171, 0.0
    %v180 = vmax.f32 %v172, 0.0
    %v181 = vperm.slane %v16, 0
    %v182 = vmul.f32 %v181, %v173
    %v183 = vmul.f32 %v181, %v174
    %v184 = vmul.f32 %v181, %v175
    %v185 = vmul.f32 %v181, %v176
    %v186 = vmul.f32 %v181, %v177
    %v187 = vmul.f32 %v181, %v178
    %v188 = vmul.f32 %v181, %v179
    %v189 = vmul.f32 %v181, %v180
    %v190 = vadd.f32 %v157, %v182
    %v191 = vadd.f32 %v158, %v183
    %v192 = vadd.f32 %v159, %v184
    %v193 = vadd.f32 %v160, %v185
    %v194 = vadd.f32 %v161, %v186
    %v195 = vadd.f32 %v162, %v187
    %v196 = vadd.f32 %v163, %v188
    %v197 = vadd.f32 %v164, %v189
    %v198 = vsub.f32 %v40, -0.5
    %v199 = vsub.f32 %v41, -0.5
    %v200 = vsub.f32 %v42, -0.5
    %v201 = vsub.f32 %v43, -0.5
    %v202 = vsub.f32 %v44, -0.5
    %v203 = vsub.f32 %v45, -0.5
    %v204 = vsub.f32 %v46, -0.5
    %v205 = vsub.f32 %v47, -0.5
    %v206 = vmax.f32 %v198, 0.0
    %v207 = vmax.f32 %v199, 0.0
    %v208 = vmax.f32 %v200, 0.0
    %v209 = vmax.f32 %v201, 0.0
    %v210 = vmax.f32 %v202, 0.0
    %v211 = vmax.f32 %v203, 0.0
    %v212 = vmax.f32 %v204, 0.0
    %v213 = vmax.f32 %v205, 0.0
    %v214 = vperm.slane %v17, 0
    %v215 = vmul.f32 %v214, %v206
    %v216 = vmul.f32 %v214, %v207
    %v217 = vmul.f32 %v214, %v208
    %v218 = vmul.f32 %v214, %v209
    %v219 = vmul.f32 %v214, %v210
    %v220 = vmul.f32 %v214, %v211
    %v221 = vmul.f32 %v214, %v212
    %v222 = vmul.f32 %v214, %v213
    %v223 = vadd.f32 %v190, %v215
    %v224 = vadd.f32 %v191, %v216
    %v225 = vadd.f32 %v192, %v217
    %v226 = vadd.f32 %v193, %v218
    %v227 = vadd.f32 %v194, %v219
    %v228 = vadd.f32 %v195, %v220
    %v229 = vadd.f32 %v196, %v221
    %v230 = vadd.f32 %v197, %v222
    %v231 = vsub.f32 %v40, -0.4
    %v232 = vsub.f32 %v41, -0.4
    %v233 = vsub.f32 %v42, -0.4
    %v234 = vsub.f32 %v43, -0.4
    %v235 = vsub.f32 %v44, -0.4
    %v236 = vsub.f32 %v45, -0.4
    %v237 = vsub.f32 %v46, -0.4
    %v238 = vsub.f32 %v47, -0.4
    %v239 = vmax.f32 %v231, 0.0
    %v240 = vmax.f32 %v232, 0.0
    %v241 = vmax.f32 %v233, 0.0
    %v242 = vmax.f32 %v234, 0.0
    %v243 = vmax.f32 %v235, 0.0
    %v244 = vmax.f32 %v236, 0.0
    %v245 = vmax.f32 %v237, 0.0
    %v246 = vmax.f32 %v238, 0.0
    %v247 = vperm.slane %v18, 0
    %v248 = vmul.f32 %v247, %v239
    %v249 = vmul.f32 %v247, %v240
    %v250 = vmul.f32 %v247, %v241
    %v251 = vmul.f32 %v247, %v242
    %v252 = vmul.f32 %v247, %v243
    %v253 = vmul.f32 %v247, %v244
    %v254 = vmul.f32 %v247, %v245
    %v255 = vmul.f32 %v247, %v246
    %v256 = vadd.f32 %v223, %v248
    %v257 = vadd.f32 %v224, %v249
    %v258 = vadd.f32 %v225, %v250
    %v259 = vadd.f32 %v226, %v251
    %v260 = vadd.f32 %v227, %v252
    %v261 = vadd.f32 %v228, %v253
    %v262 = vadd.f32 %v229, %v254
    %v263 = vadd.f32 %v230, %v255
    %v264 = vsub.f32 %v40, -0.3
    %v265 = vsub.f32 %v41, -0.3
    %v266 = vsub.f32 %v42, -0.3
    %v267 = vsub.f32 %v43, -0.3
    %v268 = vsub.f32 %v44, -0.3
    %v269 = vsub.f32 %v45, -0.3
    %v270 = vsub.f32 %v46, -0.3
    %v271 = vsub.f32 %v47, -0.3
    %v272 = vmax.f32 %v264, 0.0
    %v273 = vmax.f32 %v265, 0.0
    %v274 = vmax.f32 %v266, 0.0
    %v275 = vmax.f32 %v267, 0.0
    %v276 = vmax.f32 %v268, 0.0
    %v277 = vmax.f32 %v269, 0.0
    %v278 = vmax.f32 %v270, 0.0
    %v279 = vmax.f32 %v271, 0.0
    %v280 = vperm.slane %v19, 0
    %v281 = vmul.f32 %v280, %v272
    %v282 = vmul.f32 %v280, %v273
    %v283 = vmul.f32 %v280, %v274
    %v284 = vmul.f32 %v280, %v275
    %v285 = vmul.f32 %v280, %v276
    %v286 = vmul.f32 %v280, %v277
    %v287 = vmul.f32 %v280, %v278
    %v288 = vmul.f32 %v280, %v279
    %v289 = vadd.f32 %v256, %v281
    %v290 = vadd.f32 %v257, %v282
    %v291 = vadd.f32 %v258, %v283
    %v292 = vadd.f32 %v259, %v284
    %v293 = vadd.f32 %v260, %v285
    %v294 = vadd.f32 %v261, %v286
    %v295 = vadd.f32 %v262, %v287
    %v296 = vadd.f32 %v263, %v288
    %v297 = vsub.f32 %v40, -0.2
    %v298 = vsub.f32 %v41, -0.2
    %v299 = vsub.f32 %v42, -0.2
    %v300 = vsub.f32 %v43, -0.2
    %v301 = vsub.f32 %v44, -0.2
    %v302 = vsub.f32 %v45, -0.2
    %v303 = vsub.f32 %v46, -0.2
    %v304 = vsub.f32 %v47, -0.2
    %v305 = vmax.f32 %v297, 0.0
    %v306 = vmax.f32 %v298, 0.0
    %v307 = vmax.f32 %v299, 0.0
    %v308 = vmax.f32 %v300, 0.0
    %v309 = vmax.f32 %v301, 0.0
    %v310 = vmax.f32 %v302, 0.0
    %v311 = vmax.f32 %v303, 0.0
    %v312 = vmax.f32 %v304, 0.0
    %v313 = vperm.slane %v20, 0
    %v314 = vmul.f32 %v313, %v305
    %v315 = vmul.f32 %v313, %v306
    %v316 = vmul.f32 %v313, %v307
    %v317 = vmul.f32 %v313, %v308
    %v318 = vmul.f32 %v313, %v309
    %v319 = vmul.f32 %v313, %v310
    %v320 = vmul.f32 %v313, %v311
    %v321 = vmul.f32 %v313, %v312
    %v322 = vadd.f32 %v289, %v314
    %v323 = vadd.f32 %v290, %v315
    %v324 = vadd.f32 %v291, %v316
    %v325 = vadd.f32 %v292, %v317
    %v326 = vadd.f32 %v293, %v318
    %v327 = vadd.f32 %v294, %v319
    %v328 = vadd.f32 %v295, %v320
    %v329 = vadd.f32 %v296, %v321
    %v330 = vsub.f32 %v40, -0.1
    %v331 = vsub.f32 %v41, -0.1
    %v332 = vsub.f32 %v42, -0.1
    %v333 = vsub.f32 %v43, -0.1
    %v334 = vsub.f32 %v44, -0.1
    %v335 = vsub.f32 %v45, -0.1
    %v336 = vsub.f32 %v46, -0.1
    %v337 = vsub.f32 %v47, -0.1
    %v338 = vmax.f32 %v330, 0.0
    %v339 = vmax.f32 %v331, 0.0
    %v340 = vmax.f32 %v332, 0.0
    %v341 = vmax.f32 %v333, 0.0
    %v342 = vmax.f32 %v334, 0.0
    %v343 = vmax.f32 %v335, 0.0
    %v344 = vmax.f32 %v336, 0.0
    %v345 = vmax.f32 %v337, 0.0
    %v346 = vperm.slane %v21, 0
    %v347 = vmul.f32 %v346, %v338
    %v348 = vmul.f32 %v346, %v339
    %v349 = vmul.f32 %v346, %v340
    %v350 = vmul.f32 %v346, %v341
    %v351 = vmul.f32 %v346, %v342
    %v352 = vmul.f32 %v346, %v343
    %v353 = vmul.f32 %v346, %v344
    %v354 = vmul.f32 %v346, %v345
    %v355 = vadd.f32 %v322, %v347
    %v356 = vadd.f32 %v323, %v348
    %v357 = vadd.f32 %v324, %v349
    %v358 = vadd.f32 %v325, %v350
    %v359 = vadd.f32 %v326, %v351
    %v360 = vadd.f32 %v327, %v352
    %v361 = vadd.f32 %v328, %v353
    %v362 = vadd.f32 %v329, %v354
    %v363 = vmax.f32 %v40, 0.0
    %v364 = vmax.f32 %v41, 0.0
    %v365 = vmax.f32 %v42, 0.0
    %v366 = vmax.f32 %v43, 0.0
    %v367 = vmax.f32 %v44, 0.0
    %v368 = vmax.f32 %v45, 0.0
    %v369 = vmax.f32 %v46, 0.0
    %v370 = vmax.f32 %v47, 0.0
    %v371 = vperm.slane %v22, 0
    %v372 = vmul.f32 %v371, %v363
    %v373 = vmul.f32 %v371, %v364
    %v374 = vmul.f32 %v371, %v365
    %v375 = vmul.f32 %v371, %v366
    %v376 = vmul.f32 %v371, %v367
    %v377 = vmul.f32 %v371, %v368
    %v378 = vmul.f32 %v371, %v369
    %v379 = vmul.f32 %v371, %v370
    %v380 = vadd.f32 %v355, %v372
    %v381 = vadd.f32 %v356, %v373
    %v382 = vadd.f32 %v357, %v374
    %v383 = vadd.f32 %v358, %v375
    %v384 = vadd.f32 %v359, %v376
    %v385 = vadd.f32 %v360, %v377
    %v386 = vadd.f32 %v361, %v378
    %v387 = vadd.f32 %v362, %v379
    %v388 = vsub.f32 %v40, 0.1
    %v389 = vsub.f32 %v41, 0.1
    %v390 = vsub.f32 %v42, 0.1
    %v391 = vsub.f32 %v43, 0.1
    %v392 = vsub.f32 %v44, 0.1
    %v393 = vsub.f32 %v45, 0.1
    %v394 = vsub.f32 %v46, 0.1
    %v395 = vsub.f32 %v47, 0.1
    %v396 = vmax.f32 %v388, 0.0
    %v397 = vmax.f32 %v389, 0.0
    %v398 = vmax.f32 %v390, 0.0
    %v399 = vmax.f32 %v391, 0.0
    %v400 = vmax.f32 %v392, 0.0
    %v401 = vmax.f32 %v393, 0.0
    %v402 = vmax.f32 %v394, 0.0
    %v403 = vmax.f32 %v395, 0.0
    %v404 = vperm.slane %v23, 0
    %v405 = vmul.f32 %v404, %v396
    %v406 = vmul.f32 %v404, %v397
    %v407 = vmul.f32 %v404, %v398
    %v408 = vmul.f32 %v404, %v399
    %v409 = vmul.f32 %v404, %v400
    %v410 = vmul.f32 %v404, %v401
    %v411 = vmul.f32 %v404, %v402
    %v412 = vmul.f32 %v404, %v403
    %v413 = vadd.f32 %v380, %v405
    %v414 = vadd.f32 %v381, %v406
    %v415 = vadd.f32 %v382, %v407
    %v416 = vadd.f32 %v383, %v408
    %v417 = vadd.f32 %v384, %v409
    %v418 = vadd.f32 %v385, %v410
    %v419 = vadd.f32 %v386, %v411
    %v420 = vadd.f32 %v387, %v412
    %v421 = vsub.f32 %v40, 0.2
    %v422 = vsub.f32 %v41, 0.2
    %v423 = vsub.f32 %v42, 0.2
    %v424 = vsub.f32 %v43, 0.2
    %v425 = vsub.f32 %v44, 0.2
    %v426 = vsub.f32 %v45, 0.2
    %v427 = vsub.f32 %v46, 0.2
    %v428 = vsub.f32 %v47, 0.2
    %v429 = vmax.f32 %v421, 0.0
    %v430 = vmax.f32 %v422, 0.0
    %v431 = vmax.f32 %v423, 0.0
    %v432 = vmax.f32 %v424, 0.0
    %v433 = vmax.f32 %v425, 0.0
    %v434 = vmax.f32 %v426, 0.0
    %v435 = vmax.f32 %v427, 0.0
    %v436 = vmax.f32 %v428, 0.0
    %v437 = vperm.slane %v24, 0
    %v438 = vmul.f32 %v437, %v429
    %v439 = vmul.f32 %v437, %v430
    %v440 = vmul.f32 %v437, %v431
    %v441 = vmul.f32 %v437, %v432
    %v442 = vmul.f32 %v437, %v433
    %v443 = vmul.f32 %v437, %v434
    %v444 = vmul.f32 %v437, %v435
    %v445 = vmul.f32 %v437, %v436
    %v446 = vadd.f32 %v413, %v438
    %v447 = vadd.f32 %v414, %v439
    %v448 = vadd.f32 %v415, %v440
    %v449 = vadd.f32 %v416, %v441
    %v450 = vadd.f32 %v417, %v442
    %v451 = vadd.f32 %v418, %v443
    %v452 = vadd.f32 %v419, %v444
    %v453 = vadd.f32 %v420, %v445
    %v454 = vsub.f32 %v40, 0.3
    %v455 = vsub.f32 %v41, 0.3
    %v456 = vsub.f32 %v42, 0.3
    %v457 = vsub.f32 %v43, 0.3
    %v458 = vsub.f32 %v44, 0.3
    %v459 = vsub.f32 %v45, 0.3
    %v460 = vsub.f32 %v46, 0.3
    %v461 = vsub.f32 %v47, 0.3
    %v462 = vmax.f32 %v454, 0.0
    %v463 = vmax.f32 %v455, 0.0
    %v464 = vmax.f32 %v456, 0.0
    %v465 = vmax.f32 %v457, 0.0
    %v466 = vmax.f32 %v458, 0.0
    %v467 = vmax.f32 %v459, 0.0
    %v468 = vmax.f32 %v460, 0.0
    %v469 = vmax.f32 %v461, 0.0
    %v470 = vperm.slane %v25, 0
    %v471 = vmul.f32 %v470, %v462
    %v472 = vmul.f32 %v470, %v463
    %v473 = vmul.f32 %v470, %v464
    %v474 = vmul.f32 %v470, %v465
    %v475 = vmul.f32 %v470, %v466
    %v476 = vmul.f32 %v470, %v467
    %v477 = vmul.f32 %v470, %v468
    %v478 = vmul.f32 %v470, %v469
    %v479 = vadd.f32 %v446, %v471
    %v480 = vadd.f32 %v447, %v472
    %v481 = vadd.f32 %v448, %v473
    %v482 = vadd.f32 %v449, %v474
    %v483 = vadd.f32 %v450, %v475
    %v484 = vadd.f32 %v451, %v476
    %v485 = vadd.f32 %v452, %v477
    %v486 = vadd.f32 %v453, %v478
    %v487 = vsub.f32 %v40, 0.4
    %v488 = vsub.f32 %v41, 0.4
    %v489 = vsub.f32 %v42, 0.4
    %v490 = vsub.f32 %v43, 0.4
    %v491 = vsub.f32 %v44, 0.4
    %v492 = vsub.f32 %v45, 0.4
    %v493 = vsub.f32 %v46, 0.4
    %v494 = vsub.f32 %v47, 0.4
    %v495 = vmax.f32 %v487, 0.0
    %v496 = vmax.f32 %v488, 0.0
    %v497 = vmax.f32 %v489, 0.0
    %v498 = vmax.f32 %v490, 0.0
    %v499 = vmax.f32 %v491, 0.0
    %v500 = vmax.f32 %v492, 0.0
    %v501 = vmax.f32 %v493, 0.0
    %v502 = vmax.f32 %v494, 0.0
    %v503 = vperm.slane %v26, 0
    %v504 = vmul.f32 %v503, %v495
    %v505 = vmul.f32 %v503, %v496
    %v506 = vmul.f32 %v503, %v497
    %v507 = vmul.f32 %v503, %v498
    %v508 = vmul.f32 %v503, %v499
    %v509 = vmul.f32 %v503, %v500
    %v510 = vmul.f32 %v503, %v501
    %v511 = vmul.f32 %v503, %v502
    %v512 = vadd.f32 %v479, %v504
    %v513 = vadd.f32 %v480, %v505
    %v514 = vadd.f32 %v481, %v506
    %v515 = vadd.f32 %v482, %v507
    %v516 = vadd.f32 %v483, %v508
    %v517 = vadd.f32 %v484, %v509
    %v518 = vadd.f32 %v485, %v510
    %v519 = vadd.f32 %v486, %v511
    %v520 = vsub.f32 %v40, 0.5
    %v521 = vsub.f32 %v41, 0.5
    %v522 = vsub.f32 %v42, 0.5
    %v523 = vsub.f32 %v43, 0.5
    %v524 = vsub.f32 %v44, 0.5
    %v525 = vsub.f32 %v45, 0.5
    %v526 = vsub.f32 %v46, 0.5
    %v527 = vsub.f32 %v47, 0.5
    %v528 = vmax.f32 %v520, 0.0
    %v529 = vmax.f32 %v521, 0.0
    %v530 = vmax.f32 %v522, 0.0
    %v531 = vmax.f32 %v523, 0.0
    %v532 = vmax.f32 %v524, 0.0
    %v533 = vmax.f32 %v525, 0.0
    %v534 = vmax.f32 %v526, 0.0
    %v535 = vmax.f32 %v527, 0.0
    %v536 = vperm.slane %v27, 0
    %v537 = vmul.f32 %v536, %v528
    %v538 = vmul.f32 %v536, %v529
    %v539 = vmul.f32 %v536, %v530
    %v540 = vmul.f32 %v536, %v531
    %v541 = vmul.f32 %v536, %v532
    %v542 = vmul.f32 %v536, %v533
    %v543 = vmul.f32 %v536, %v534
    %v544 = vmul.f32 %v536, %v535
    %v545 = vadd.f32 %v512, %v537
    %v546 = vadd.f32 %v513, %v538
    %v547 = vadd.f32 %v514, %v539
    %v548 = vadd.f32 %v515, %v540
    %v549 = vadd.f32 %v516, %v541
    %v550 = vadd.f32 %v517, %v542
    %v551 = vadd.f32 %v518, %v543
    %v552 = vadd.f32 %v519, %v544
    %v553 = vsub.f32 %v40, 0.6
    %v554 = vsub.f32 %v41, 0.6
    %v555 = vsub.f32 %v42, 0.6
    %v556 = vsub.f32 %v43, 0.6
    %v557 = vsub.f32 %v44, 0.6
    %v558 = vsub.f32 %v45, 0.6
    %v559 = vsub.f32 %v46, 0.6
    %v560 = vsub.f32 %v47, 0.6
    %v561 = vmax.f32 %v553, 0.0
    %v562 = vmax.f32 %v554, 0.0
    %v563 = vmax.f32 %v555, 0.0
    %v564 = vmax.f32 %v556, 0.0
    %v565 = vmax.f32 %v557, 0.0
    %v566 = vmax.f32 %v558, 0.0
    %v567 = vmax.f32 %v559, 0.0
    %v568 = vmax.f32 %v560, 0.0
    %v569 = vperm.slane %v28, 0
    %v570 = vmul.f32 %v569, %v561
    %v571 = vmul.f32 %v569, %v562
    %v572 = vmul.f32 %v569, %v563
    %v573 = vmul.f32 %v569, %v564
    %v574 = vmul.f32 %v569, %v565
    %v575 = vmul.f32 %v569, %v566
    %v576 = vmul.f32 %v569, %v567
    %v577 = vmul.f32 %v569, %v568
    %v578 = vadd.f32 %v545, %v570
    %v579 = vadd.f32 %v546, %v571
    %v580 = vadd.f32 %v547, %v572
    %v581 = vadd.f32 %v548, %v573
    %v582 = vadd.f32 %v549, %v574
    %v583 = vadd.f32 %v550, %v575
    %v584 = vadd.f32 %v551, %v576
    %v585 = vadd.f32 %v552, %v577
    %v586 = vsub.f32 %v40, 0.7
    %v587 = vsub.f32 %v41, 0.7
    %v588 = vsub.f32 %v42, 0.7
    %v589 = vsub.f32 %v43, 0.7
    %v590 = vsub.f32 %v44, 0.7
    %v591 = vsub.f32 %v45, 0.7
    %v592 = vsub.f32 %v46, 0.7
    %v593 = vsub.f32 %v47, 0.7
    %v594 = vmax.f32 %v586, 0.0
    %v595 = vmax.f32 %v587, 0.0
    %v596 = vmax.f32 %v588, 0.0
    %v597 = vmax.f32 %v589, 0.0
    %v598 = vmax.f32 %v590, 0.0
    %v599 = vmax.f32 %v591, 0.0
    %v600 = vmax.f32 %v592, 0.0
    %v601 = vmax.f32 %v593, 0.0
    %v602 = vperm.slane %v29, 0
    %v603 = vmul.f32 %v602, %v594
    %v604 = vmul.f32 %v602, %v595
    %v605 = vmul.f32 %v602, %v596
    %v606 = vmul.f32 %v602, %v597
    %v607 = vmul.f32 %v602, %v598
    %v608 = vmul.f32 %v602, %v599
    %v609 = vmul.f32 %v602, %v600
    %v610 = vmul.f32 %v602, %v601
    %v611 = vadd.f32 %v578, %v603
    %v612 = vadd.f32 %v579, %v604
    %v613 = vadd.f32 %v580, %v605
    %v614 = vadd.f32 %v581, %v606
    %v615 = vadd.f32 %v582, %v607
    %v616 = vadd.f32 %v583, %v608
    %v617 = vadd.f32 %v584, %v609
    %v618 = vadd.f32 %v585, %v610
    %v619 = vsub.f32 %v40, 0.8
    %v620 = vsub.f32 %v41, 0.8
    %v621 = vsub.f32 %v42, 0.8
    %v622 = vsub.f32 %v43, 0.8
    %v623 = vsub.f32 %v44, 0.8
    %v624 = vsub.f32 %v45, 0.8
    %v625 = vsub.f32 %v46, 0.8
    %v626 = vsub.f32 %v47, 0.8
    %v627 = vmax.f32 %v619, 0.0
    %v628 = vmax.f32 %v620, 0.0
    %v629 = vmax.f32 %v621, 0.0
    %v630 = vmax.f32 %v622, 0.0
    %v631 = vmax.f32 %v623, 0.0
    %v632 = vmax.f32 %v624, 0.0
    %v633 = vmax.f32 %v625, 0.0
    %v634 = vmax.f32 %v626, 0.0
    %v635 = vperm.slane %v30, 0
    %v636 = vmul.f32 %v635, %v627
    %v637 = vmul.f32 %v635, %v628
    %v638 = vmul.f32 %v635, %v629
    %v639 = vmul.f32 %v635, %v630
    %v640 = vmul.f32 %v635, %v631
    %v641 = vmul.f32 %v635, %v632
    %v642 = vmul.f32 %v635, %v633
    %v643 = vmul.f32 %v635, %v634
    %v644 = vadd.f32 %v611, %v636
    %v645 = vadd.f32 %v612, %v637
    %v646 = vadd.f32 %v613, %v638
    %v647 = vadd.f32 %v614, %v639
    %v648 = vadd.f32 %v615, %v640
    %v649 = vadd.f32 %v616, %v641
    %v650 = vadd.f32 %v617, %v642
    %v651 = vadd.f32 %v618, %v643
    %v652 = vsub.f32 %v40, 0.9
    %v653 = vsub.f32 %v41, 0.9
    %v654 = vsub.f32 %v42, 0.9
    %v655 = vsub.f32 %v43, 0.9
    %v656 = vsub.f32 %v44, 0.9
    %v657 = vsub.f32 %v45, 0.9
    %v658 = vsub.f32 %v46, 0.9
    %v659 = vsub.f32 %v47, 0.9
    %v660 = vmax.f32 %v652, 0.0
    %v661 = vmax.f32 %v653, 0.0
    %v662 = vmax.f32 %v654, 0.0
    %v663 = vmax.f32 %v655, 0.0
    %v664 = vmax.f32 %v656, 0.0
    %v665 = vmax.f32 %v657, 0.0
    %v666 = vmax.f32 %v658, 0.0
    %v667 = vmax.f32 %v659, 0.0
    %v668 = vperm.slane %v31, 0
    %v669 = vmul.f32 %v668, %v660
    %v670 = vmul.f32 %v668, %v661
    %v671 = vmul.f32 %v668, %v662
    %v672 = vmul.f32 %v668, %v663
    %v673 = vmul.f32 %v668, %v664
    %v674 = vmul.f32 %v668, %v665
    %v675 = vmul.f32 %v668, %v666
    %v676 = vmul.f32 %v668, %v667
    %v677 = vadd.f32 %v644, %v669
    %v678 = vadd.f32 %v645, %v670
    %v679 = vadd.f32 %v646, %v671
    %v680 = vadd.f32 %v647, %v672
    %v681 = vadd.f32 %v648, %v673
    %v682 = vadd.f32 %v649, %v674
    %v683 = vadd.f32 %v650, %v675
    %v684 = vadd.f32 %v651, %v676
    %s685 = scalar_lea.vmem %s2, %s38
    %vm686 = vcmask 31744
    %687 = vst.msk [vmem:[%s685] sm:$0xff] %vm686, %v677
    %688 = vst.msk [vmem:[%s685 + $0x8] sm:$0xff] %vm686, %v678
    %689 = vst.msk [vmem:[%s685 + $0x10] sm:$0xff] %vm686, %v679
    %690 = vst.msk [vmem:[%s685 + $0x18] sm:$0xff] %vm686, %v680
    %691 = vst.msk [vmem:[%s685 + $0x20] sm:$0xff] %vm686, %v681
    %692 = vst.msk [vmem:[%s685 + $0x28] sm:$0xff] %vm686, %v682
    %693 = vst.msk [vmem:[%s685 + $0x30] sm:$0xff] %vm686, %v683
    %694 = vst.msk [vmem:[%s685 + $0x38] sm:$0xff] %vm686, %v684
  $region14: #{tpu_custom_call.1} parent=0 // loop_footer
    %s37 = sadd.s32 1, %s33
  $region15: #{tpu_custom_call.1} parent=0 // loop_footer_branch
    %32 = sbr.rel target = $region11
  $region16: #{tpu_custom_call.1} parent=0 // loop_exit
    _
  // Predicated region
  $region17: #{tpu_custom_call.1} parent=0 // pred_check
    _
  $region18: #{tpu_custom_call.1} parent=0 // pred_check_branch
    %696 = sbr.rel (0) target = $region20
  $region19: #{tpu_custom_call.1} parent=0 // pred_region
    _
  $region20: #{tpu_custom_call.1} parent=0 // pred_fallthru
    _
  // Predicated region
  $region21: #{tpu_custom_call.1} parent=0 // pred_check
    _
  $region22: #{tpu_custom_call.1} parent=0 // pred_check_branch
    %698 = sbr.rel (0) target = $region24
  $region23: #{tpu_custom_call.1} parent=0 // pred_region
    _
  $region24: #{tpu_custom_call.1} parent=0 // pred_fallthru
    _

</llo_original>
